<compile_context>
chip_gen: v7x
topology: tpu7x:2x2x1
jax: 0.10.0
libtpu: 0.0.40
codegen_flags: <defaults>
</compile_context>

<pallas_src>
import functools
import math

import jax
import jax.numpy as jnp
from jax.experimental import pallas as pl
from jax.experimental.pallas import tpu as pltpu


# ----------------------------------------------------------------------------
# tile picking helper: largest tile <= target that divides dim (align-friendly)
# ----------------------------------------------------------------------------
def _pick_tile(dim, target, align):
    if dim <= target:
        return dim
    t = (min(dim, target) // align) * align
    while t >= align:
        if dim % t == 0:
            return t
        t -= align
    t = min(dim, target)
    while t > 1:
        if dim % t == 0:
            return t
        t -= 1
    return dim


# ----------------------------------------------------------------------------
# Kernel 1: tiled dense  y = x @ W + b  (optionally fused GELU)
#           bf16 MXU matmul, f32 accumulator scratch, K-reduction on last grid axis
# ----------------------------------------------------------------------------
def _dense_kernel(x_ref, w_ref, b_ref, o_ref, acc_ref, *, activation):
    @pl.when(pl.program_id(2) == 0)
    def _():
        acc_ref[...] = jnp.zeros_like(acc_ref)

    acc_ref[...] += jnp.dot(x_ref[...].astype(jnp.bfloat16),
                            w_ref[...].astype(jnp.bfloat16),
                            preferred_element_type=jnp.float32)

    @pl.when(pl.program_id(2) == pl.num_programs(2) - 1)
    def _():
        y = acc_ref[...] + b_ref[...]
        if activation == "gelu":
            # TODO(synk): HF BERT uses exact erf-GELU; tanh approximation used here.
            c = jnp.float32(0.7978845608028654)
            y = 0.5 * y * (1.0 + jnp.tanh(c * (y + 0.044715 * y * y * y)))
        o_ref[...] = y


def pallas_dense(x, w, b, activation=None, tm=256, tn=256, tk=512):
    M, K = x.shape
    N = w.shape[1]
    tm = _pick_tile(M, tm, 8)
    tn = _pick_tile(N, tn, 128)
    tk = _pick_tile(K, tk, 128)
    return pl.pallas_call(
        functools.partial(_dense_kernel, activation=activation),
        out_shape=jax.ShapeDtypeStruct((M, N), jnp.float32),
        grid=(M // tm, N // tn, K // tk),
        in_specs=[
            pl.BlockSpec((tm, tk), lambda i, j, k: (i, k)),
            pl.BlockSpec((tk, tn), lambda i, j, k: (k, j)),
            pl.BlockSpec((1, tn), lambda i, j, k: (0, j)),
        ],
        out_specs=pl.BlockSpec((tm, tn), lambda i, j, k: (i, j)),
        scratch_shapes=[pltpu.VMEM((tm, tn), jnp.float32)],
        compiler_params=pltpu.CompilerParams(
            dimension_semantics=("parallel", "parallel", "arbitrary")),
    )(x, w, b.reshape(1, N))


# ----------------------------------------------------------------------------
# Kernel 2: tiled dense + residual add + LayerNorm fused in the finalize branch
#           (output tile spans the full hidden axis so LN can reduce over it)
# ----------------------------------------------------------------------------
def _dense_add_ln_kernel(x_ref, w_ref, b_ref, r_ref, g_ref, bt_ref,
                         o_ref, acc_ref, *, eps):
    @pl.when(pl.program_id(1) == 0)
    def _():
        acc_ref[...] = jnp.zeros_like(acc_ref)

    acc_ref[...] += jnp.dot(x_ref[...].astype(jnp.bfloat16),
                            w_ref[...].astype(jnp.bfloat16),
                            preferred_element_type=jnp.float32)

    @pl.when(pl.program_id(1) == pl.num_programs(1) - 1)
    def _():
        y = acc_ref[...] + b_ref[...] + r_ref[...]
        mu = jnp.mean(y, axis=-1, keepdims=True)
        d = y - mu
        var = jnp.mean(d * d, axis=-1, keepdims=True)
        o_ref[...] = d * jax.lax.rsqrt(var + eps) * g_ref[...] + bt_ref[...]


def pallas_dense_add_ln(x, w, b, res, gamma, beta, eps=1e-12, tm=256, tk=512):
    M, K = x.shape
    N = w.shape[1]
    tm = _pick_tile(M, tm, 8)
    tk = _pick_tile(K, tk, 128)
    return pl.pallas_call(
        functools.partial(_dense_add_ln_kernel, eps=eps),
        out_shape=jax.ShapeDtypeStruct((M, N), jnp.float32),
        grid=(M // tm, K // tk),
        in_specs=[
            pl.BlockSpec((tm, tk), lambda i, k: (i, k)),
            pl.BlockSpec((tk, N), lambda i, k: (k, 0)),
            pl.BlockSpec((1, N), lambda i, k: (0, 0)),
            pl.BlockSpec((tm, N), lambda i, k: (i, 0)),
            pl.BlockSpec((1, N), lambda i, k: (0, 0)),
            pl.BlockSpec((1, N), lambda i, k: (0, 0)),
        ],
        out_specs=pl.BlockSpec((tm, N), lambda i, k: (i, 0)),
        scratch_shapes=[pltpu.VMEM((tm, N), jnp.float32)],
        compiler_params=pltpu.CompilerParams(
            dimension_semantics=("parallel", "arbitrary")),
    )(x, w, b.reshape(1, N), res, gamma.reshape(1, N), beta.reshape(1, N))


# ----------------------------------------------------------------------------
# Kernel 3: row-tiled LayerNorm (no residual) — used for the embedding output
# ----------------------------------------------------------------------------
def _ln_kernel(x_ref, g_ref, b_ref, o_ref, *, eps):
    y = x_ref[...]
    mu = jnp.mean(y, axis=-1, keepdims=True)
    d = y - mu
    var = jnp.mean(d * d, axis=-1, keepdims=True)
    o_ref[...] = d * jax.lax.rsqrt(var + eps) * g_ref[...] + b_ref[...]


def pallas_layernorm(x, gamma, beta, eps=1e-12, tm=512):
    M, H = x.shape
    tm = _pick_tile(M, tm, 8)
    return pl.pallas_call(
        functools.partial(_ln_kernel, eps=eps),
        out_shape=jax.ShapeDtypeStruct((M, H), jnp.float32),
        grid=(M // tm,),
        in_specs=[
            pl.BlockSpec((tm, H), lambda i: (i, 0)),
            pl.BlockSpec((1, H), lambda i: (0, 0)),
            pl.BlockSpec((1, H), lambda i: (0, 0)),
        ],
        out_specs=pl.BlockSpec((tm, H), lambda i: (i, 0)),
        compiler_params=pltpu.CompilerParams(dimension_semantics=("parallel",)),
    )(x, gamma.reshape(1, H), beta.reshape(1, H))


# ----------------------------------------------------------------------------
# Kernel 4: attention over the fused (B, S, 3H) QKV tensor, one (batch, head)
#           per grid step; per-head (S, dh) slabs selected purely via index_map
#           (no transposes), mask kept at (B,1,S) and indexed per batch.
# ----------------------------------------------------------------------------
def _attn_kernel(q_ref, k_ref, v_ref, m_ref, o_ref, *, scale):
    q = q_ref[0].astype(jnp.bfloat16)                       # (S, dh)
    k = k_ref[0].astype(jnp.bfloat16)
    v = v_ref[0].astype(jnp.bfloat16)
    s = jax.lax.dot_general(q, k, (((1,), (1,)), ((), ())),
                            preferred_element_type=jnp.float32) * scale   # (S, S)
    s = s + m_ref[0]                                         # (1, S) broadcast over rows
    mx = jnp.max(s, axis=-1, keepdims=True)
    e = jnp.exp(s - mx)
    p = e * pl.reciprocal(jnp.sum(e, axis=-1, keepdims=True), approx=True)
    o_ref[0] = jnp.dot(p.astype(jnp.bfloat16), v, preferred_element_type=jnp.float32)


def pallas_attention(qkv, add_mask, B, S, nH, dh, scale):
    # qkv: (B, S, 3H) with Q | K | V concatenated on the hidden axis.
    # TODO(synk): requires dh to be a multiple of 128 (lane-aligned per-head slices);
    #             for dh=64 BERT-base, batch 2 heads per block instead.
    H = nH * dh
    return pl.pallas_call(
        functools.partial(_attn_kernel, scale=scale),
        out_shape=jax.ShapeDtypeStruct((B, S, H), jnp.float32),
        grid=(B, nH),
        in_specs=[
            pl.BlockSpec((1, S, dh), lambda b, h: (b, 0, h)),             # Q head h
            pl.BlockSpec((1, S, dh), lambda b, h: (b, 0, nH + h)),        # K head h
            pl.BlockSpec((1, S, dh), lambda b, h: (b, 0, 2 * nH + h)),    # V head h
            pl.BlockSpec((1, 1, S), lambda b, h: (b, 0, 0)),              # mask (B,1,S)
        ],
        out_specs=pl.BlockSpec((1, S, dh), lambda b, h: (b, 0, h)),
        compiler_params=pltpu.CompilerParams(
            dimension_semantics=("parallel", "parallel")),
    )(qkv, qkv, qkv, add_mask)


# ----------------------------------------------------------------------------
# Kernel 5: classification head = Linear + Softmax, then CrossEntropyLoss
#           (CE applied to the already-softmaxed "logits", as in the PyTorch module)
# ----------------------------------------------------------------------------
def _head_kernel(x_ref, w_ref, b_ref, lbl_ref, logits_ref, loss_ref):
    z = jnp.dot(x_ref[...], w_ref[...], preferred_element_type=jnp.float32)
    z = z + b_ref[...]
    # nn.Softmax(dim=-1)
    m = jnp.max(z, axis=-1, keepdims=True)
    e = jnp.exp(z - m)
    probs = e * pl.reciprocal(jnp.sum(e, axis=-1, keepdims=True), approx=True)
    logits_ref[...] = probs
    # CrossEntropyLoss(probs, labels) = mean_b[ logsumexp(probs_b) - probs_b[label_b] ]
    m2 = jnp.max(probs, axis=-1, keepdims=True)
    lse = jnp.log(jnp.sum(jnp.exp(probs - m2), axis=-1, keepdims=True)) + m2   # (B,1)
    B, C = probs.shape
    col = jax.lax.broadcasted_iota(jnp.int32, (B, C), 1)
    onehot = (col == lbl_ref[...]).astype(jnp.float32)
    picked = jnp.sum(probs * onehot, axis=-1, keepdims=True)                   # (B,1)
    loss_ref[...] = jnp.sum(lse - picked, axis=0, keepdims=True) / jnp.float32(B)


def pallas_head(x, w, b, labels):
    B, K = x.shape
    C = w.shape[1]
    logits, loss = pl.pallas_call(
        _head_kernel,
        out_shape=(jax.ShapeDtypeStruct((B, C), jnp.float32),
                   jax.ShapeDtypeStruct((1, 1), jnp.float32)),
        grid=(1,),
        in_specs=[
            pl.BlockSpec((B, K), lambda i: (0, 0)),
            pl.BlockSpec((K, C), lambda i: (0, 0)),
            pl.BlockSpec((1, C), lambda i: (0, 0)),
            pl.BlockSpec((B, 1), lambda i: (0, 0)),
        ],
        out_specs=(pl.BlockSpec((B, C), lambda i: (0, 0)),
                   pl.BlockSpec((1, 1), lambda i: (0, 0))),
    )(x, w, b.reshape(1, C), labels.reshape(B, 1).astype(jnp.int32))
    return loss[0, 0], logits


# ----------------------------------------------------------------------------
# Deterministic parameter init (synthetic; shapes follow a tiny BERT config)
# ----------------------------------------------------------------------------
def init_params(key, cfg):
    V, H, I, L = cfg["vocab"], cfg["hidden"], cfg["intermediate"], cfg["layers"]
    P, T, n, C = cfg["max_pos"], cfg["type_vocab"], cfg["n"], cfg["label_num"]

    def nrm(k, shape):
        return 0.02 * jax.random.normal(k, shape, dtype=jnp.float32)

    keys = iter(jax.random.split(key, 4 + 4 * L))
    params = {
        "word_emb": nrm(next(keys), (V, H)),
        "pos_emb": nrm(next(keys), (P, H)),
        "type_emb": nrm(next(keys), (T, H)),
        "emb_ln_g": jnp.ones((H,), jnp.float32),
        "emb_ln_b": jnp.zeros((H,), jnp.float32),
        "fc_w": nrm(next(keys), (n * H, C)),
        "fc_b": jnp.zeros((C,), jnp.float32),
        "layers": [],
    }
    for _ in range(L):
        params["layers"].append({
            # fused Q|K|V projection: (H, 3H)
            "qkv_w": nrm(next(keys), (H, 3 * H)),
            "qkv_b": jnp.zeros((3 * H,), jnp.float32),
            "ao_w": nrm(next(keys), (H, H)), "ao_b": jnp.zeros((H,), jnp.float32),
            "attn_ln_g": jnp.ones((H,), jnp.float32),
            "attn_ln_b": jnp.zeros((H,), jnp.float32),
            "i_w": nrm(next(keys), (H, I)), "i_b": jnp.zeros((I,), jnp.float32),
            "o_w": nrm(next(keys), (I, H)), "o_b": jnp.zeros((H,), jnp.float32),
            "out_ln_g": jnp.ones((H,), jnp.float32),
            "out_ln_b": jnp.zeros((H,), jnp.float32),
        })
    return params


# ----------------------------------------------------------------------------
# Forward: BERT encoder (output_hidden_states) + n-CLS head + CE loss
# ----------------------------------------------------------------------------
def forward(params, input_ids, token_type_ids, attention_mask, labels, cfg):
    B, S = input_ids.shape
    H, nH, n = cfg["hidden"], cfg["heads"], cfg["n"]
    dh = H // nH

    # ---- embeddings (gather is glue) + row-tiled LayerNorm kernel ----------
    emb = (params["word_emb"][input_ids]
           + params["pos_emb"][jnp.arange(S)][None, :, :]
           + params["type_emb"][token_type_ids])                      # (B,S,H)
    x = pallas_layernorm(emb.reshape(B * S, H),
                         params["emb_ln_g"], params["emb_ln_b"])
    hidden_states = [x.reshape(B, S, H)]

    # ---- additive attention mask kept at (B, 1, S) --------------------------
    add_mask = (1.0 - attention_mask.astype(jnp.float32))[:, None, :] * -10000.0

    for lyr in params["layers"]:
        # fused Q/K/V projection: one (B*S,H) x (H,3H) matmul
        qkv = pallas_dense(x, lyr["qkv_w"], lyr["qkv_b"])              # (B*S, 3H)
        ctx = pallas_attention(qkv.reshape(B, S, 3 * H), add_mask,
                               B, S, nH, dh, 1.0 / math.sqrt(dh))      # (B, S, H)
        # attention output projection + residual + LayerNorm (fused epilogue)
        x_attn = pallas_dense_add_ln(ctx.reshape(B * S, H),
                                     lyr["ao_w"], lyr["ao_b"],
                                     x, lyr["attn_ln_g"], lyr["attn_ln_b"])
        # FFN
        inter = pallas_dense(x_attn, lyr["i_w"], lyr["i_b"], activation="gelu")
        x = pallas_dense_add_ln(inter, lyr["o_w"], lyr["o_b"],
                                x_attn, lyr["out_ln_g"], lyr["out_ln_b"])
        hidden_states.append(x.reshape(B, S, H))

    # ---- last-n CLS tokens -> concat -> (dropout=identity, eval) -> head ---
    n_cls = jnp.concatenate([h[:, :1, :] for h in hidden_states[-n:]], axis=1)  # (B,n,H)
    n_cls = n_cls.reshape(B, n * H)
    # TODO(synk): nn.Dropout(0.2) is identity at inference; training-mode mask omitted.
    loss, logits = pallas_head(n_cls, params["fc_w"], params["fc_b"], labels)
    return loss, logits


# ----------------------------------------------------------------------------
if __name__ == "__main__":
    # head_dim = hidden/heads = 128 so per-head BlockSpec slices are lane-aligned.
    cfg = dict(vocab=100, hidden=256, intermediate=512, layers=3, heads=2,
               max_pos=16, type_vocab=2, n=3, label_num=2)
    B, S = 2, 8

    key = jax.random.PRNGKey(0)
    kp, kid, klbl = jax.random.split(key, 3)
    params = init_params(kp, cfg)

    input_ids = jax.random.randint(kid, (B, S), 0, cfg["vocab"], dtype=jnp.int32)
    token_type_ids = jnp.zeros((B, S), jnp.int32)
    attention_mask = jnp.ones((B, S), jnp.int32)
    labels = jax.random.randint(klbl, (B,), 0, cfg["label_num"], dtype=jnp.int32)

    loss, logits = forward(params, input_ids, token_type_ids,
                           attention_mask, labels, cfg)
    jax.block_until_ready((loss, logits))
    assert logits.shape == (B, cfg["label_num"])
    assert loss.shape == ()
    print("KERNEL_OK")
</pallas_src>

<mosaic_0001>
module attributes {stable_mosaic.version = 11 : i64} {
  func.func @_ln_kernel(%arg0: i32, %arg1: memref<16x256xf32, #tpu.memory_space<vmem>>, %arg2: memref<1x256xf32, #tpu.memory_space<vmem>>, %arg3: memref<1x256xf32, #tpu.memory_space<vmem>>, %arg4: memref<16x256xf32, #tpu.memory_space<vmem>>) attributes {dimension_semantics = [#tpu.dimension_semantics<parallel>], iteration_bounds = array<i64: 1>, scalar_prefetch = 0 : i64, scratch_operands = 0 : i64, tpu.core_type = #tpu.core_type<tc>, window_params = [{transform_indices = @transform_0, window_bounds = array<i64: 16, 256>}, {pipeline_mode = #tpu.pipeline_mode<synchronous>, transform_indices = @transform_1, window_bounds = array<i64: 1, 256>}, {pipeline_mode = #tpu.pipeline_mode<synchronous>, transform_indices = @transform_2, window_bounds = array<i64: 1, 256>}, {transform_indices = @transform_3, window_bounds = array<i64: 16, 256>}]} {
    %c0 = arith.constant 0 : index
    %c0_0 = arith.constant 0 : index
    %0 = vector.load %arg1[%c0, %c0_0] : memref<16x256xf32, #tpu.memory_space<vmem>>, vector<16x256xf32>
    %cst = arith.constant dense<0.000000e+00> : vector<16xf32>
    %1 = vector.multi_reduction <add>, %0, %cst [1] : vector<16x256xf32> to vector<16xf32>
    %2 = vector.shape_cast %1 : vector<16xf32> to vector<16x1xf32>
    %cst_1 = arith.constant 2.560000e+02 : f32
    %3 = vector.broadcast %cst_1 : f32 to vector<16x1xf32>
    %4 = arith.divf %2, %3 : vector<16x1xf32>
    %5 = vector.broadcast %4 : vector<16x1xf32> to vector<16x256xf32>
    %6 = arith.subf %0, %5 : vector<16x256xf32>
    %7 = arith.mulf %6, %6 : vector<16x256xf32>
    %cst_2 = arith.constant dense<0.000000e+00> : vector<16xf32>
    %8 = vector.multi_reduction <add>, %7, %cst_2 [1] : vector<16x256xf32> to vector<16xf32>
    %9 = vector.shape_cast %8 : vector<16xf32> to vector<16x1xf32>
    %cst_3 = arith.constant 2.560000e+02 : f32
    %10 = vector.broadcast %cst_3 : f32 to vector<16x1xf32>
    %11 = arith.divf %9, %10 : vector<16x1xf32>
    %cst_4 = arith.constant 9.99999996E-13 : f32
    %12 = vector.broadcast %cst_4 : f32 to vector<16x1xf32>
    %13 = arith.addf %11, %12 : vector<16x1xf32>
    %14 = math.rsqrt %13 : vector<16x1xf32>
    %15 = vector.broadcast %14 : vector<16x1xf32> to vector<16x256xf32>
    %16 = arith.mulf %6, %15 : vector<16x256xf32>
    %c0_5 = arith.constant 0 : index
    %c0_6 = arith.constant 0 : index
    %17 = vector.load %arg2[%c0_5, %c0_6] : memref<1x256xf32, #tpu.memory_space<vmem>>, vector<1x256xf32>
    %18 = vector.broadcast %17 : vector<1x256xf32> to vector<16x256xf32>
    %19 = arith.mulf %16, %18 : vector<16x256xf32>
    %c0_7 = arith.constant 0 : index
    %c0_8 = arith.constant 0 : index
    %20 = vector.load %arg3[%c0_7, %c0_8] : memref<1x256xf32, #tpu.memory_space<vmem>>, vector<1x256xf32>
    %21 = vector.broadcast %20 : vector<1x256xf32> to vector<16x256xf32>
    %22 = arith.addf %19, %21 : vector<16x256xf32>
    %c0_9 = arith.constant 0 : index
    %c0_10 = arith.constant 0 : index
    %23 = vector.load %arg4[%c0_9, %c0_10] : memref<16x256xf32, #tpu.memory_space<vmem>>, vector<16x256xf32>
    tpu.vector_store %arg4[%c0_9, %c0_10], %22 {strides = array<i32>} : memref<16x256xf32, #tpu.memory_space<vmem>>, vector<16x256xf32>,
    return
  }
  func.func @transform_0(%arg0: i32) -> (i32, i32) {
    %c0_i32 = arith.constant 0 : i32
    %c0_i32_0 = arith.constant 0 : i32
    return %arg0, %c0_i32 : i32, i32
  }
  func.func @transform_1(%arg0: i32) -> (i32, i32) {
    %c0_i32 = arith.constant 0 : i32
    %c0_i32_0 = arith.constant 0 : i32
    %c0_i32_1 = arith.constant 0 : i32
    return %c0_i32, %c0_i32_0 : i32, i32
  }
  func.func @transform_2(%arg0: i32) -> (i32, i32) {
    %c0_i32 = arith.constant 0 : i32
    %c0_i32_0 = arith.constant 0 : i32
    %c0_i32_1 = arith.constant 0 : i32
    return %c0_i32, %c0_i32_0 : i32, i32
  }
  func.func @transform_3(%arg0: i32) -> (i32, i32) {
    %c0_i32 = arith.constant 0 : i32
    %c0_i32_0 = arith.constant 0 : i32
    return %arg0, %c0_i32 : i32, i32
  }
}

</mosaic_0001>

<llo_original>
// kernel: tpu_custom_call.1
$region0: #{tpu_custom_call.1}
  #allocation0 [shape = 'u32[]', space=smem, size = 0x4, offset = 0x4, fixed_abs, tag = 'smem constant byte address 0x4 - core index']
  #allocation1 [shape = 'u32[144,128]{1,0:T(1,128)}', space=vmem, size = 0x12000, scoped, tag = 'internal scratch']
  %s0 = inlined_call_operand.hbm [shape: f32[16,256], index: 0, kind: input, shape index: {}]
  %s1 = inlined_call_operand.vmem [shape: f32[1,256], index: 1, kind: input, shape index: {}]
  %s2 = inlined_call_operand.vmem [shape: f32[1,256], index: 2, kind: input, shape index: {}]
  %s3 = inlined_call_operand.hbm [shape: f32[16,256], index: 3, kind: output, shape index: {}]
  %s4 = sld [smem:[#allocation0]]
  $region26: #{tpu_custom_call.1} parent=0
    _
  %s6 = ssub.s32 1, %s4
  %s7 = scalar_select 0, %s6, %s4
  $region1: #{tpu_custom_call.1} parent=0
    #allocation2 [shape = 'u8[16384]{0}', space=vmem, size = 0x4000, scoped, tag = 'input window, operand 0, single buffered']
    #allocation3 [shape = 's32[1]{0}', space=sflag, size = 0x4, scoped, tag = 'scoped memory for tpu_custom_call.1']
    #allocation4 [shape = 's32[1]{0}', space=sflag, size = 0x4, scoped, tag = 'scoped memory for tpu_custom_call.1']
    #allocation5 [shape = 'u8[16384]{0}', space=vmem, size = 0x4000, scoped, tag = 'output window, operand 0, single buffered']
    %8 = vsyncpa [#allocation3], 0
    %9 = vsyncpa [#allocation4], 0
    // Predicated region
    $region2: #{tpu_custom_call.1} parent=1 // pred_check
      _
    $region3: #{tpu_custom_call.1} parent=1 // pred_check_branch
      %11 = sbr.rel (0) target = $region5
    $region4: #{tpu_custom_call.1} parent=1 // pred_region
      %s13 = ssub.s32 512, 512
      %14 = vsyncadd [#allocation3], %s13
      %s15 = sshll.u32 [#allocation2], 4
      %s16 = int_to_ptr.vmem [resolvable:$true] %s15
      %21 = dma.hbm_to_vmem [thread:$0]  %s0, 512, %s16, [#allocation3], 256, 256, 16
    $region5: #{tpu_custom_call.1} parent=1 // pred_fallthru
      _
    // Predicated region
    $region6: #{tpu_custom_call.1} parent=1 // pred_check
      _
    $region7: #{tpu_custom_call.1} parent=1 // pred_check_branch
      %23 = sbr.rel (0) target = $region9
    $region8: #{tpu_custom_call.1} parent=1 // pred_region
      _
    $region9: #{tpu_custom_call.1} parent=1 // pred_fallthru
      _
    // Predicated region
    $region10: #{tpu_custom_call.1} parent=1 // pred_check
      _
    $region11: #{tpu_custom_call.1} parent=1 // pred_check_branch
      %25 = sbr.rel (0) target = $region13
    $region12: #{tpu_custom_call.1} parent=1 // pred_region
      _
    $region13: #{tpu_custom_call.1} parent=1 // pred_fallthru
      _
    // Predicated region
    $region14: #{tpu_custom_call.1} parent=1 // pred_check
      _
    $region15: #{tpu_custom_call.1} parent=1 // pred_check_branch
      %27 = sbr.rel (0) target = $region17
    $region16: #{tpu_custom_call.1} parent=1 // pred_region
      %28 = dma.done [#allocation3], 512
    $region17: #{tpu_custom_call.1} parent=1 // pred_fallthru
      _
    %v29 = vld [vmem:[#allocation2] sm:$0xff]
    %v30 = vld [vmem:[#allocation2 + $0x8] sm:$0xff]
    %v31 = vld [vmem:[#allocation2 + $0x10] sm:$0xff]
    %v32 = vld [vmem:[#allocation2 + $0x18] sm:$0xff]
    %v33 = vadd.f32 %v29, %v30
    %34 = vadd.xlane.f32.xlu0 %v33
    %v35 = vpop.xlane.xlu0 %34
    %v36 = vadd.f32 %v31, %v32
    %37 = vadd.xlane.f32.xlu0 %v36
    %v38 = vpop.xlane.xlu0 %37
    %v39 = vrcp.pop 256.0
    %v40 = vmul.f32 %v35, %v39
    %v41 = vmul.f32 %v38, %v39
    %v42 = vsub.f32 %v29, %v40
    %v43 = vsub.f32 %v30, %v40
    %v44 = vsub.f32 %v31, %v41
    %v45 = vsub.f32 %v32, %v41
    %v46 = vmul.f32 %v42, %v42
    %v47 = vmul.f32 %v43, %v43
    %v48 = vmul.f32 %v44, %v44
    %v49 = vmul.f32 %v45, %v45
    %v50 = vadd.f32 %v46, %v47
    %51 = vadd.xlane.f32.xlu0 %v50
    %v52 = vpop.xlane.xlu0 %51
    %v53 = vadd.f32 %v48, %v49
    %54 = vadd.xlane.f32.xlu0 %v53
    %v55 = vpop.xlane.xlu0 %54
    %v56 = vmul.f32 %v52, %v39
    %v57 = vmul.f32 %v55, %v39
    %v58 = vadd.f32 %v56, 1e-12
    %v59 = vadd.f32 %v57, 1e-12
    %v60 = vrsqrt.pop %v58
    %v61 = vrsqrt.pop %v59
    %v62 = vmul.f32 %v42, %v60
    %v63 = vmul.f32 %v43, %v60
    %v64 = vmul.f32 %v44, %v61
    %v65 = vmul.f32 %v45, %v61
    %v66 = vld [vmem:[%s1] sm:$0x3]
    %v68 = vlaneseq
    %v69 = vshrl.u32 %v68, 7
    %v70 = vsub.s32 0, %v69
    %v71 = vrot.slane %v66, %v70
    %v72 = vlaneseq
    %v73 = vshrl.u32 %v72, 7
    %v74 = vsub.s32 1, %v73
    %v75 = vrot.slane %v66, %v74
    %v78 = vmul.f32 %v62, %v71
    %v79 = vmul.f32 %v63, %v75
    %v80 = vmul.f32 %v64, %v71
    %v81 = vmul.f32 %v65, %v75
    %v82 = vld [vmem:[%s2] sm:$0x3]
    %v84 = vlaneseq
    %v85 = vshrl.u32 %v84, 7
    %v86 = vsub.s32 0, %v85
    %v87 = vrot.slane %v82, %v86
    %v88 = vlaneseq
    %v89 = vshrl.u32 %v88, 7
    %v90 = vsub.s32 1, %v89
    %v91 = vrot.slane %v82, %v90
    %v94 = vadd.f32 %v78, %v87
    %v95 = vadd.f32 %v79, %v91
    %v96 = vadd.f32 %v80, %v87
    %v97 = vadd.f32 %v81, %v91
    %98 = vst [vmem:[#allocation5] sm:$0xff] %v94
    %99 = vst [vmem:[#allocation5 + $0x8] sm:$0xff] %v95
    %100 = vst [vmem:[#allocation5 + $0x10] sm:$0xff] %v96
    %101 = vst [vmem:[#allocation5 + $0x18] sm:$0xff] %v97
    // Predicated region
    $region18: #{tpu_custom_call.1} parent=1 // pred_check
      _
    $region19: #{tpu_custom_call.1} parent=1 // pred_check_branch
      %103 = sbr.rel (0) target = $region21
    $region20: #{tpu_custom_call.1} parent=1 // pred_region
      %s105 = ssub.s32 512, 512
      %106 = vsyncadd [#allocation4], %s105
      %s107 = sshll.u32 [#allocation5], 4
      %s108 = int_to_ptr.vmem [resolvable:$true] %s107
      %113 = dma.vmem_to_hbm [thread:$0]  %s108, 512, %s3, [#allocation4], 256, 256, 16
    $region21: #{tpu_custom_call.1} parent=1 // pred_fallthru
      _
    // Predicated region
    $region22: #{tpu_custom_call.1} parent=1 // pred_check
      _
    $region23: #{tpu_custom_call.1} parent=1 // pred_check_branch
      %115 = sbr.rel (0) target = $region25
    $region24: #{tpu_custom_call.1} parent=1 // pred_region
      %116 = dma.done [#allocation4], 512
    $region25: #{tpu_custom_call.1} parent=1 // pred_fallthru
      _
    %117 = vsyncpa [#allocation3], 1
    %118 = vsyncpa [#allocation4], 1

</llo_original>
